<compile_context>
chip_gen: v7x
topology: tpu7x:2x2x1
jax: 0.10.0
libtpu: 0.0.40
codegen_flags: <defaults>
</compile_context>

<pallas_src>
import jax
import jax.numpy as jnp
from jax.experimental import pallas as pl
from jax.experimental.pallas import tpu as pltpu

_C = 512                          # lane (last) dim of the slab; multiple of 128
_TM_MAX = 2048                    # max rows per grid step (4 MiB f32 tile)
_VMEM_LIMIT = 40 * 1024 * 1024    # covers double-buffered in+out tiles on all gens


def linear_sigmoid_kernel(w_ref, b_ref, x_ref, o_ref):
    # w_ref, b_ref: (1, 1) f32 scalars in SMEM.  x_ref, o_ref: (tm, C) VMEM tiles.
    w = w_ref[0, 0]
    b = b_ref[0, 0]
    y = x_ref[...].astype(jnp.float32) * w + b              # VPU fma (cast in-register)
    # sigmoid(y) = 0.5*tanh(0.5*y) + 0.5 -> single EUP transcendental, no divide.
    o_ref[...] = (0.5 * jnp.tanh(0.5 * y) + 0.5).astype(o_ref.dtype)


def _tile_rows(rows: int) -> int:
    """Rows per grid step: multiple of 8, >=2 grid steps when rows>8, VMEM-capped."""
    if rows <= 8:
        return rows               # single full-extent block (full-dim escape)
    half = -(-rows // 2)          # cdiv(rows, 2): at least 2 steps for megacore
    half = ((half + 7) // 8) * 8
    return min(_TM_MAX, half)


def _launch(x2d, w2d, b2d):
    rows, cols = x2d.shape
    tm = _tile_rows(rows)
    return pl.pallas_call(
        linear_sigmoid_kernel,
        out_shape=jax.ShapeDtypeStruct((rows, cols), x2d.dtype),
        grid=(pl.cdiv(rows, tm),),
        in_specs=[
            pl.BlockSpec(memory_space=pltpu.SMEM),         # weight scalar
            pl.BlockSpec(memory_space=pltpu.SMEM),         # bias scalar
            pl.BlockSpec((tm, cols), lambda i: (i, 0)),    # x tile
        ],
        out_specs=pl.BlockSpec((tm, cols), lambda i: (i, 0)),
        compiler_params=pltpu.CompilerParams(
            dimension_semantics=("parallel",),             # shard row-tiles across TCs
            vmem_limit_bytes=_VMEM_LIMIT,
            allow_input_fusion=[False, False, True],       # fuse slice/reshape into x fetch
        ),
    )(w2d, b2d, x2d)


@jax.jit
def model_forward(x, weight, bias):
    """x: (..., 1); weight: (1, 1); bias: (1,) -> sigmoid(linear(x)), same shape/dtype as x."""
    orig_shape = x.shape
    flat = x.reshape(-1)
    n = flat.shape[0]
    w2d = weight.reshape(1, 1).astype(jnp.float32)
    b2d = bias.reshape(1, 1).astype(jnp.float32)

    rows = n // _C
    rem = n - rows * _C

    pieces = []
    if rows > 0:
        # Aligned bulk: contiguous reshape (bitcast) -> kernel; no pad, no slice-back.
        bulk = (flat if rem == 0 else flat[: rows * _C]).reshape(rows, _C)
        pieces.append(_launch(bulk, w2d, b2d).reshape(-1))
    if rem > 0:
        tail = flat[rows * _C:]
        if rows == 0:
            # Tiny input (< 512 elems): still exercise the kernel on one (r,128) tile.
            rt = -(-rem // 128)
            padded = rt * 128
            tail_in = jnp.pad(tail, (0, padded - rem)) if padded != rem else tail
            tail_out = _launch(tail_in.reshape(rt, 128), w2d, b2d).reshape(-1)[:rem]
        else:
            # <512-element tail of a large input: cheaper as plain jnp than a 2nd launch.
            tail_out = jax.nn.sigmoid(
                tail.astype(jnp.float32) * w2d[0, 0] + b2d[0, 0]
            ).astype(x.dtype)
        pieces.append(tail_out)

    out = pieces[0] if len(pieces) == 1 else jnp.concatenate(pieces)
    return out.reshape(orig_shape)


if __name__ == "__main__":
    key = jax.random.PRNGKey(0)
    kx, kw, kb, kx2, kx3 = jax.random.split(key, 5)

    # nn.Linear(1, 1) parameters: weight (1, 1), bias (1,)
    weight = jax.random.uniform(kw, (1, 1), jnp.float32, minval=-1.0, maxval=1.0)
    bias = jax.random.uniform(kb, (1,), jnp.float32, minval=-1.0, maxval=1.0)

    def ref_fn(v):
        return jax.nn.sigmoid(v @ weight.T + bias)

    # 1) Tiny input (kernel runs on a single padded (1, 128) tile).
    x1 = jax.random.normal(kx, (8, 1), jnp.float32)
    o1 = jax.block_until_ready(model_forward(x1, weight, bias))
    assert o1.shape == (8, 1)
    assert jnp.allclose(o1, ref_fn(x1), atol=2e-6)

    # 2) Unaligned N: aligned bulk through the kernel + jnp tail (no full pad/slice).
    x2 = jax.random.normal(kx2, (3000, 1), jnp.float32)
    o2 = jax.block_until_ready(model_forward(x2, weight, bias))
    assert o2.shape == (3000, 1)
    assert jnp.allclose(o2, ref_fn(x2), atol=2e-6)

    # 3) Aligned N with a multi-step grid and a partial trailing row block.
    x3 = jax.random.normal(kx3, (10240, 1), jnp.float32)
    o3 = jax.block_until_ready(model_forward(x3, weight, bias))
    assert o3.shape == (10240, 1)
    assert jnp.allclose(o3, ref_fn(x3), atol=2e-6)

    print("KERNEL_OK")
</pallas_src>

<mosaic_0001>
module attributes {stable_mosaic.version = 11 : i64} {
  func.func @linear_sigmoid_kernel(%arg0: i32, %arg1: memref<1x1xf32, #tpu.memory_space<smem>>, %arg2: memref<1x1xf32, #tpu.memory_space<smem>>, %arg3: memref<1x128xf32, #tpu.memory_space<vmem>>, %arg4: memref<1x128xf32, #tpu.memory_space<vmem>>) attributes {dimension_semantics = [#tpu.dimension_semantics<parallel>], iteration_bounds = array<i64: 1>, scalar_prefetch = 0 : i64, scratch_operands = 0 : i64, tpu.core_type = #tpu.core_type<tc>, window_params = [{transform_indices = @transform_0, window_bounds = array<i64: 1, 1>}, {transform_indices = @transform_1, window_bounds = array<i64: 1, 1>}, {transform_indices = @transform_2, window_bounds = array<i64: 1, 128>}, {transform_indices = @transform_3, window_bounds = array<i64: 1, 128>}]} {
    %c0 = arith.constant 0 : index
    %c0_0 = arith.constant 0 : index
    %0 = memref.load %arg1[%c0, %c0_0] : memref<1x1xf32, #tpu.memory_space<smem>>
    %c0_1 = arith.constant 0 : index
    %c0_2 = arith.constant 0 : index
    %1 = memref.load %arg2[%c0_1, %c0_2] : memref<1x1xf32, #tpu.memory_space<smem>>
    %c0_3 = arith.constant 0 : index
    %c0_4 = arith.constant 0 : index
    %2 = vector.load %arg3[%c0_3, %c0_4] : memref<1x128xf32, #tpu.memory_space<vmem>>, vector<1x128xf32>
    %3 = vector.broadcast %0 : f32 to vector<1x128xf32>
    %4 = arith.mulf %2, %3 : vector<1x128xf32>
    %5 = vector.broadcast %1 : f32 to vector<1x128xf32>
    %6 = arith.addf %4, %5 : vector<1x128xf32>
    %cst = arith.constant 5.000000e-01 : f32
    %7 = vector.broadcast %cst : f32 to vector<1x128xf32>
    %8 = arith.mulf %7, %6 : vector<1x128xf32>
    %9 = math.tanh %8 : vector<1x128xf32>
    %cst_5 = arith.constant 5.000000e-01 : f32
    %10 = vector.broadcast %cst_5 : f32 to vector<1x128xf32>
    %11 = arith.mulf %10, %9 : vector<1x128xf32>
    %cst_6 = arith.constant 5.000000e-01 : f32
    %12 = vector.broadcast %cst_6 : f32 to vector<1x128xf32>
    %13 = arith.addf %11, %12 : vector<1x128xf32>
    %c0_7 = arith.constant 0 : index
    %c0_8 = arith.constant 0 : index
    %14 = vector.load %arg4[%c0_7, %c0_8] : memref<1x128xf32, #tpu.memory_space<vmem>>, vector<1x128xf32>
    tpu.vector_store %arg4[%c0_7, %c0_8], %13 {strides = array<i32>} : memref<1x128xf32, #tpu.memory_space<vmem>>, vector<1x128xf32>,
    return
  }
  func.func @transform_0(%arg0: i32) -> (i32, i32) {
    %c0_i32 = arith.constant 0 : i32
    %c0_i32_0 = arith.constant 0 : i32
    %c0_i32_1 = arith.constant 0 : i32
    return %c0_i32, %c0_i32_0 : i32, i32
  }
  func.func @transform_1(%arg0: i32) -> (i32, i32) {
    %c0_i32 = arith.constant 0 : i32
    %c0_i32_0 = arith.constant 0 : i32
    %c0_i32_1 = arith.constant 0 : i32
    return %c0_i32, %c0_i32_0 : i32, i32
  }
  func.func @transform_2(%arg0: i32) -> (i32, i32) {
    %c0_i32 = arith.constant 0 : i32
    %c0_i32_0 = arith.constant 0 : i32
    return %arg0, %c0_i32 : i32, i32
  }
  func.func @transform_3(%arg0: i32) -> (i32, i32) {
    %c0_i32 = arith.constant 0 : i32
    %c0_i32_0 = arith.constant 0 : i32
    return %arg0, %c0_i32 : i32, i32
  }
}

</mosaic_0001>

<llo_original>
// kernel: model_forward.2
$region0: #{model_forward.2}
  #allocation0 [shape = 'u32[]', space=smem, size = 0x4, offset = 0x4, fixed_abs, tag = 'smem constant byte address 0x4 - core index']
  #allocation1 [shape = 'u32[144,128]{1,0:T(1,128)}', space=vmem, size = 0x12000, scoped, tag = 'internal scratch']
  #allocation2 [shape = 'f32[1,1]{1,0:T(1,128)S(6)}', space=smem, size = 0x200, scoped, tag = 'scoped memory for model_forward.2']
  #allocation3 [shape = 'f32[1,1]{1,0:T(1,128)S(6)}', space=smem, size = 0x200, scoped, tag = 'scoped memory for model_forward.2']
  #allocation4 [shape = 'u32[2048]{0}', space=vmem, size = 0x2000, scoped, tag = 'scoped memory for model_forward.2']
  #allocation5 [shape = 'u32[2048]{0}', space=vmem, size = 0x2000, scoped, tag = 'scoped memory for model_forward.2']
  #allocation6 [shape = 'u32[2048]{0}', space=vmem, size = 0x2000, scoped, tag = 'scoped memory for model_forward.2']
  #allocation7 [shape = 'u32[2048]{0}', space=vmem, size = 0x2000, scoped, tag = 'scoped memory for model_forward.2']
  #allocation8 [shape = 'u32[2048]{0}', space=vmem, size = 0x2000, scoped, tag = 'scoped memory for model_forward.2']
  %s0 = inlined_call_operand.<no memory space> [shape: f32[1,1], index: 0, kind: input, shape index: {}]
  %s1 = inlined_call_operand.<no memory space> [shape: f32[1,1], index: 1, kind: input, shape index: {}]
  %s2 = inlined_call_operand.vmem [shape: f32[8], index: 2, kind: input, shape index: {}]
  %s3 = inlined_call_operand.<no memory space> [shape: f32[], index: 3, kind: input, shape index: {}]
  %s4 = inlined_call_operand.vmem [shape: f32[1,128], index: 4, kind: output, shape index: {}]
  %s5 = sld [smem:[#allocation0]]
  $region22: #{model_forward.2} parent=0
    _
  %s7 = ssub.s32 1, %s5
  %s8 = scalar_select 0, %s7, %s5
  %9 = sst [smem:[#allocation2]] %s0
  %10 = sst [smem:[#allocation3]] %s1
  %v11 = vstv %s3
  $region1: #{model_forward.2} parent=0
    #allocation9 [shape = 'u8[512]{0}', space=vmem, size = 0x400, dematerialized = true, scoped, tag = 'FusionAdapter Buffer %fusion.1 = f32[1,128]{1,0:T(1,128)} fusion(%param_2.2, %param_3), kind=kLoop, calls=%fused_computation.1.clone, metadata={op_name="jit(model_forward)/reshape" stack_frame_id=10}']
    // Predicated region
    $region2: #{model_forward.2} parent=1 // pred_check
      _
    $region3: #{model_forward.2} parent=1 // pred_check_branch
      %13 = sbr.rel (0) target = $region5
    $region4: #{model_forward.2} parent=1 // pred_region
      _
    $region5: #{model_forward.2} parent=1 // pred_fallthru
      _
    // Predicated region
    $region6: #{model_forward.2} parent=1 // pred_check
      _
    $region7: #{model_forward.2} parent=1 // pred_check_branch
      %15 = sbr.rel (0) target = $region9
    $region8: #{model_forward.2} parent=1 // pred_region
      _
    $region9: #{model_forward.2} parent=1 // pred_fallthru
      _
    // Predicated region
    $region10: #{model_forward.2} parent=1 // pred_check
      _
    $region11: #{model_forward.2} parent=1 // pred_check_branch
      %17 = sbr.rel (0) target = $region13
    $region12: #{model_forward.2} parent=1 // pred_region
      _
    $region13: #{model_forward.2} parent=1 // pred_fallthru
      _
    %v18 = vld [vmem:[%s2] sm:$0x1]
    %v19 = vlaneseq
    %vm21 = vcmp.lt.s32.totalorder %v19, 8
    %v22 = vsel %vm21, %v18, %v11
    %24 = vst [vmem:[#allocation9] sm:$0x1] %v22
    %s25 = sld [smem:[#allocation2]]
    %s26 = sld [smem:[#allocation3]]
    %v27 = vld [vmem:[#allocation9] sm:$0x1]
    %v28 = vstv %s25
    %v29 = vmul.f32 %v27, %v28
    %v30 = vstv %s26
    %v31 = vadd.f32 %v29, %v30
    %v32 = vmul.f32 %v31, 0.5
    %v33 = vtanh.pop %v32
    %v34 = vmul.f32 %v33, 0.5
    %v35 = vadd.f32 %v34, 0.5
    %36 = vst [vmem:[%s4] sm:$0x1] %v35
    // Predicated region
    $region14: #{model_forward.2} parent=1 // pred_check
      _
    $region15: #{model_forward.2} parent=1 // pred_check_branch
      %38 = sbr.rel (0) target = $region17
    $region16: #{model_forward.2} parent=1 // pred_region
      _
    $region17: #{model_forward.2} parent=1 // pred_fallthru
      _
    // Predicated region
    $region18: #{model_forward.2} parent=1 // pred_check
      _
    $region19: #{model_forward.2} parent=1 // pred_check_branch
      %40 = sbr.rel (0) target = $region21
    $region20: #{model_forward.2} parent=1 // pred_region
      _
    $region21: #{model_forward.2} parent=1 // pred_fallthru
      _

</llo_original>
